<compile_context>
chip_gen: v5e
topology: v5e:2x2
jax: 0.10.0
libtpu: 0.0.40
codegen_flags: <defaults>
</compile_context>

<pallas_src>
import functools
import math

import jax
import jax.numpy as jnp
from jax import lax
from jax.experimental import pallas as pl
from jax.experimental.pallas import tpu as pltpu

LANES = 128


def _device_kind():
    try:
        return jax.devices()[0].device_kind.lower()
    except Exception:
        return ""


def _num_tensorcores(kind):
    # v7x has 2 TensorCores per chip; everything else we target has 1.
    return 2 if (("v7" in kind) or ("7x" in kind)) else 1


def _target_block_bytes(kind):
    # ~2 MiB per input block everywhere; v6e has the most scoped-VMEM
    # headroom (32 MiB default, 128 MiB physical), so go to 4 MiB there.
    if "v6" in kind:
        return 4 * 1024 * 1024
    return 2 * 1024 * 1024


def _floss_partial_kernel(pred_ref, targ_ref, out_ref, *,
                          tile_rows, slab, rows_valid, nblocks,
                          steps_per_core, need_mask, unroll):
    c = pl.program_id(0)   # per-core partial-sum slot
    i = pl.program_id(1)   # reduction step ("arbitrary")

    # out_ref is the resident per-core accumulator block: (1, 3, 8, LANES)
    #   [0] sum(pred * target), [1] sum(pred), [2] sum(target)
    @pl.when(i == 0)
    def _():
        out_ref[...] = jnp.zeros_like(out_ref)

    block_idx = c * steps_per_core + i
    row0 = block_idx * tile_rows
    nslabs = tile_rows // slab

    def accumulate(masked):
        if masked:
            # Hoisted once per (rare) masked block; never in the fast path.
            local = lax.broadcasted_iota(jnp.int32, (slab, LANES), 0)

        def body(j, carry):
            acc_pt, acc_p, acc_t = carry
            r = pl.multiple_of(j * slab, slab)
            p = pred_ref[pl.ds(r, slab), :].astype(jnp.float32)
            t = targ_ref[pl.ds(r, slab), :].astype(jnp.float32)
            if masked:
                valid = (row0 + r + local) < rows_valid
                zero = jnp.float32(0.0)
                p = jnp.where(valid, p, zero)
                t = jnp.where(valid, t, zero)
            p3 = p.reshape(slab // 8, 8, LANES)
            t3 = t.reshape(slab // 8, 8, LANES)
            return (acc_pt + (p3 * t3).sum(axis=0),
                    acc_p + p3.sum(axis=0),
                    acc_t + t3.sum(axis=0))

        z = jnp.zeros((8, LANES), jnp.float32)
        acc_pt, acc_p, acc_t = lax.fori_loop(0, nslabs, body, (z, z, z),
                                             unroll=unroll)
        out_ref[0, 0] += acc_pt
        out_ref[0, 1] += acc_p
        out_ref[0, 2] += acc_t

    if need_mask:
        # Only the last valid block and clamped out-of-range blocks need the
        # mask; everything else takes the unmasked fast path.
        is_tail = block_idx >= (nblocks - 1)

        @pl.when(jnp.logical_not(is_tail))
        def _():
            accumulate(masked=False)

        @pl.when(is_tail)
        def _():
            accumulate(masked=True)
    else:
        accumulate(masked=False)


def _run_partials(p2, t2, rows, tile_rows, slab, ncores, dim_semantics):
    nblocks = pl.cdiv(rows, tile_rows)
    steps_per_core = pl.cdiv(nblocks, ncores)
    need_mask = (ncores * steps_per_core * tile_rows) != rows

    if nblocks == ncores * steps_per_core:
        def in_map(c, i):
            return (c * steps_per_core + i, 0)
    else:
        def in_map(c, i):
            # Clamp so out-of-range blocks re-read valid data; the kernel
            # masks their contribution to zero.
            return (jnp.minimum(c * steps_per_core + i, nblocks - 1), 0)

    kernel = functools.partial(
        _floss_partial_kernel,
        tile_rows=tile_rows, slab=slab, rows_valid=rows, nblocks=nblocks,
        steps_per_core=steps_per_core, need_mask=need_mask,
        unroll=max(1, min(2, tile_rows // slab)))

    return pl.pallas_call(
        kernel,
        out_shape=jax.ShapeDtypeStruct((ncores, 3, 8, LANES), jnp.float32),
        grid_spec=pl.GridSpec(
            grid=(ncores, steps_per_core),
            in_specs=[
                pl.BlockSpec((tile_rows, LANES), in_map),
                pl.BlockSpec((tile_rows, LANES), in_map),
            ],
            out_specs=pl.BlockSpec((1, 3, 8, LANES),
                                   lambda c, i: (c, 0, 0, 0)),
        ),
        compiler_params=pltpu.CompilerParams(
            dimension_semantics=dim_semantics),
    )(p2, t2)


def floss(pred, target, beta=0.5, log_like=False, *, block_bytes=None):
    """F-measure loss matching FLoss.forward (returns a scalar)."""
    assert pred.shape == target.shape
    total = int(math.prod(pred.shape)) if pred.shape else 1
    assert total > 0

    kind = _device_kind()
    if block_bytes is None:
        block_bytes = _target_block_bytes(kind)
    itemsize = max(jnp.dtype(pred.dtype).itemsize,
                   jnp.dtype(target.dtype).itemsize)

    p_flat = jnp.ravel(pred)
    t_flat = jnp.ravel(target)

    # Kernel handles the largest (8*128)-aligned prefix; the tiny remainder
    # (< 8*128 + 128 elements) is summed directly in JAX -- no jnp.pad, no
    # full-array copy in the common, exactly-divisible case.
    rows_all = total // LANES
    rows_k = (rows_all // 8) * 8
    kern_elems = rows_k * LANES

    if kern_elems < total:
        p_tail = p_flat[kern_elems:].astype(jnp.float32)
        t_tail = t_flat[kern_elems:].astype(jnp.float32)
        tail_tp = jnp.sum(p_tail * t_tail)
        tail_p = jnp.sum(p_tail)
        tail_t = jnp.sum(t_tail)
    else:
        tail_tp = tail_p = tail_t = jnp.float32(0.0)

    if rows_k == 0:
        tp, sp, st = tail_tp, tail_p, tail_t
    else:
        if kern_elems == total:
            p2 = p_flat.reshape(rows_k, LANES)          # metadata-only
            t2 = t_flat.reshape(rows_k, LANES)
        else:
            p2 = p_flat[:kern_elems].reshape(rows_k, LANES)
            t2 = t_flat[:kern_elems].reshape(rows_k, LANES)

        # Dtype-adaptive tile: target `block_bytes` per input block,
        # kept a multiple of the 64-row slab used by the inner loop.
        target_rows = max(64, (block_bytes // (LANES * itemsize)) // 64 * 64)
        if rows_k >= 64:
            tile_rows = min(target_rows, (rows_k // 64) * 64)
        else:
            tile_rows = rows_k                          # multiple of 8
        slab = next(d for d in (64, 32, 16, 8) if tile_rows % d == 0)

        ncores = _num_tensorcores(kind)
        if ncores > 1:
            # v7x: ask for a real 2-way TensorCore split; fall back to the
            # serial single-core layout if this lowering is rejected.
            try:
                partials = _run_partials(
                    p2, t2, rows_k, tile_rows, slab, ncores,
                    (pltpu.CORE_PARALLEL, pltpu.ARBITRARY))
                partials = jax.block_until_ready(partials)
            except Exception:
                partials = _run_partials(
                    p2, t2, rows_k, tile_rows, slab, 1,
                    ("arbitrary", "arbitrary"))
        else:
            partials = _run_partials(
                p2, t2, rows_k, tile_rows, slab, 1,
                ("arbitrary", "arbitrary"))

        sums = jnp.sum(partials, axis=(0, 2, 3))
        tp = sums[0] + tail_tp
        sp = sums[1] + tail_p
        st = sums[2] + tail_t

    eps = jnp.float32(1e-10)
    b = jnp.float32(beta)
    h = b * st + sp
    fmeasure = (jnp.float32(1.0) + b) * tp / (h + eps)
    if log_like:
        return -jnp.log(fmeasure)
    return jnp.float32(1.0) - fmeasure


def _floss_ref(pred, target, beta=0.5, log_like=False):
    eps = 1e-10
    p = pred.astype(jnp.float32)
    t = target.astype(jnp.float32)
    tp = jnp.sum(p * t)
    h = beta * jnp.sum(t) + jnp.sum(p)
    fmeasure = (1.0 + beta) * tp / (h + eps)
    return -jnp.log(fmeasure) if log_like else 1.0 - fmeasure


if __name__ == "__main__":
    key = jax.random.PRNGKey(0)
    k1, k2 = jax.random.split(key)

    # Small NCHW shapes: batch=2, channels=4, spatial=16x16
    pred = jax.nn.sigmoid(jax.random.normal(k1, (2, 4, 16, 16), jnp.float32))
    target = (jax.random.uniform(k2, (2, 4, 16, 16)) > 0.5).astype(jnp.float32)

    loss = floss(pred, target, beta=0.5, log_like=False)
    loss = jax.block_until_ready(loss)

    ref = _floss_ref(pred, target, beta=0.5, log_like=False)
    assert jnp.allclose(loss, ref, rtol=1e-5, atol=1e-6), (loss, ref)

    print("KERNEL_OK")
</pallas_src>

<mosaic_0001>
module attributes {stable_mosaic.version = 11 : i64} {
  func.func @_floss_partial_kernel(%arg0: i32, %arg1: i32, %arg2: memref<16x128xf32, #tpu.memory_space<vmem>>, %arg3: memref<16x128xf32, #tpu.memory_space<vmem>>, %arg4: memref<1x3x8x128xf32, #tpu.memory_space<vmem>>) attributes {dimension_semantics = [#tpu.dimension_semantics<arbitrary>, #tpu.dimension_semantics<arbitrary>], iteration_bounds = array<i64: 1, 1>, scalar_prefetch = 0 : i64, scratch_operands = 0 : i64, tpu.core_type = #tpu.core_type<tc>, window_params = [{transform_indices = @transform_0, window_bounds = array<i64: 16, 128>}, {transform_indices = @transform_1, window_bounds = array<i64: 16, 128>}, {transform_indices = @transform_2, window_bounds = array<i64: 1, 3, 8, 128>}]} {
    %c0_i32 = arith.constant 0 : i32
    %0 = arith.cmpi eq, %arg1, %c0_i32 : i32
    %1 = arith.extui %0 : i1 to i32
    %c0_i32_0 = arith.constant 0 : i32
    %2 = arith.cmpi ne, %1, %c0_i32_0 : i32
    scf.if %2 {
      %cst_28 = arith.constant 0.000000e+00 : f32
      %37 = vector.broadcast %cst_28 : f32 to vector<1x3x8x128xf32>
      %c0_29 = arith.constant 0 : index
      %c0_30 = arith.constant 0 : index
      %c0_31 = arith.constant 0 : index
      %c0_32 = arith.constant 0 : index
      %38 = vector.load %arg4[%c0_29, %c0_30, %c0_31, %c0_32] : memref<1x3x8x128xf32, #tpu.memory_space<vmem>>, vector<1x3x8x128xf32>
      tpu.vector_store %arg4[%c0_29, %c0_30, %c0_31, %c0_32], %37 {strides = array<i32>} : memref<1x3x8x128xf32, #tpu.memory_space<vmem>>, vector<1x3x8x128xf32>,
    } else {
    }
    %cst = arith.constant 0.000000e+00 : f32
    %3 = vector.broadcast %cst : f32 to vector<8x128xf32>
    %c0_i32_1 = arith.constant 0 : i32
    %c16_i32 = arith.constant 16 : i32
    %4 = arith.muli %c0_i32_1, %c16_i32 : i32
    %5 = tpu.assume_multiple %4, 16 : i32
    %6 = arith.index_cast %5 : i32 to index
    %c0 = arith.constant 0 : index
    %7 = vector.load %arg2[%6, %c0] : memref<16x128xf32, #tpu.memory_space<vmem>>, vector<16x128xf32>
    %8 = arith.index_cast %5 : i32 to index
    %c0_2 = arith.constant 0 : index
    %9 = vector.load %arg3[%8, %c0_2] : memref<16x128xf32, #tpu.memory_space<vmem>>, vector<16x128xf32>
    %10 = vector.shape_cast %7 : vector<16x128xf32> to vector<2x8x128xf32>
    %11 = vector.shape_cast %9 : vector<16x128xf32> to vector<2x8x128xf32>
    %12 = arith.mulf %10, %11 : vector<2x8x128xf32>
    %cst_3 = arith.constant dense<0.000000e+00> : vector<8x128xf32>
    %13 = vector.multi_reduction <add>, %12, %cst_3 [0] : vector<2x8x128xf32> to vector<8x128xf32>
    %14 = arith.addf %3, %13 : vector<8x128xf32>
    %cst_4 = arith.constant dense<0.000000e+00> : vector<8x128xf32>
    %15 = vector.multi_reduction <add>, %10, %cst_4 [0] : vector<2x8x128xf32> to vector<8x128xf32>
    %16 = arith.addf %3, %15 : vector<8x128xf32>
    %cst_5 = arith.constant dense<0.000000e+00> : vector<8x128xf32>
    %17 = vector.multi_reduction <add>, %11, %cst_5 [0] : vector<2x8x128xf32> to vector<8x128xf32>
    %18 = arith.addf %3, %17 : vector<8x128xf32>
    %c1_i32 = arith.constant 1 : i32
    %c0_6 = arith.constant 0 : index
    %c0_7 = arith.constant 0 : index
    %c0_8 = arith.constant 0 : index
    %c0_9 = arith.constant 0 : index
    %19 = vector.load %arg4[%c0_6, %c0_7, %c0_8, %c0_9] : memref<1x3x8x128xf32, #tpu.memory_space<vmem>>, vector<1x1x8x128xf32>
    %20 = vector.shape_cast %19 : vector<1x1x8x128xf32> to vector<8x128xf32>
    %21 = arith.addf %20, %14 : vector<8x128xf32>
    %c0_10 = arith.constant 0 : index
    %c0_11 = arith.constant 0 : index
    %c0_12 = arith.constant 0 : index
    %c0_13 = arith.constant 0 : index
    %22 = vector.load %arg4[%c0_10, %c0_11, %c0_12, %c0_13] : memref<1x3x8x128xf32, #tpu.memory_space<vmem>>, vector<1x1x8x128xf32>
    %23 = vector.shape_cast %22 : vector<1x1x8x128xf32> to vector<8x128xf32>
    %24 = vector.shape_cast %21 : vector<8x128xf32> to vector<1x1x8x128xf32>
    tpu.vector_store %arg4[%c0_10, %c0_11, %c0_12, %c0_13], %24 {strides = array<i32>} : memref<1x3x8x128xf32, #tpu.memory_space<vmem>>, vector<1x1x8x128xf32>,
    %c0_14 = arith.constant 0 : index
    %c1 = arith.constant 1 : index
    %c0_15 = arith.constant 0 : index
    %c0_16 = arith.constant 0 : index
    %25 = vector.load %arg4[%c0_14, %c1, %c0_15, %c0_16] : memref<1x3x8x128xf32, #tpu.memory_space<vmem>>, vector<1x1x8x128xf32>
    %26 = vector.shape_cast %25 : vector<1x1x8x128xf32> to vector<8x128xf32>
    %27 = arith.addf %26, %16 : vector<8x128xf32>
    %c0_17 = arith.constant 0 : index
    %c1_18 = arith.constant 1 : index
    %c0_19 = arith.constant 0 : index
    %c0_20 = arith.constant 0 : index
    %28 = vector.load %arg4[%c0_17, %c1_18, %c0_19, %c0_20] : memref<1x3x8x128xf32, #tpu.memory_space<vmem>>, vector<1x1x8x128xf32>
    %29 = vector.shape_cast %28 : vector<1x1x8x128xf32> to vector<8x128xf32>
    %30 = vector.shape_cast %27 : vector<8x128xf32> to vector<1x1x8x128xf32>
    tpu.vector_store %arg4[%c0_17, %c1_18, %c0_19, %c0_20], %30 {strides = array<i32>} : memref<1x3x8x128xf32, #tpu.memory_space<vmem>>, vector<1x1x8x128xf32>,
    %c0_21 = arith.constant 0 : index
    %c2 = arith.constant 2 : index
    %c0_22 = arith.constant 0 : index
    %c0_23 = arith.constant 0 : index
    %31 = vector.load %arg4[%c0_21, %c2, %c0_22, %c0_23] : memref<1x3x8x128xf32, #tpu.memory_space<vmem>>, vector<1x1x8x128xf32>
    %32 = vector.shape_cast %31 : vector<1x1x8x128xf32> to vector<8x128xf32>
    %33 = arith.addf %32, %18 : vector<8x128xf32>
    %c0_24 = arith.constant 0 : index
    %c2_25 = arith.constant 2 : index
    %c0_26 = arith.constant 0 : index
    %c0_27 = arith.constant 0 : index
    %34 = vector.load %arg4[%c0_24, %c2_25, %c0_26, %c0_27] : memref<1x3x8x128xf32, #tpu.memory_space<vmem>>, vector<1x1x8x128xf32>
    %35 = vector.shape_cast %34 : vector<1x1x8x128xf32> to vector<8x128xf32>
    %36 = vector.shape_cast %33 : vector<8x128xf32> to vector<1x1x8x128xf32>
    tpu.vector_store %arg4[%c0_24, %c2_25, %c0_26, %c0_27], %36 {strides = array<i32>} : memref<1x3x8x128xf32, #tpu.memory_space<vmem>>, vector<1x1x8x128xf32>,
    return
  }
  func.func @transform_0(%arg0: i32, %arg1: i32) -> (i32, i32) {
    %c1_i32 = arith.constant 1 : i32
    %0 = arith.muli %arg0, %c1_i32 : i32
    %1 = arith.addi %0, %arg1 : i32
    %c0_i32 = arith.constant 0 : i32
    %c0_i32_0 = arith.constant 0 : i32
    return %1, %c0_i32 : i32, i32
  }
  func.func @transform_1(%arg0: i32, %arg1: i32) -> (i32, i32) {
    %c1_i32 = arith.constant 1 : i32
    %0 = arith.muli %arg0, %c1_i32 : i32
    %1 = arith.addi %0, %arg1 : i32
    %c0_i32 = arith.constant 0 : i32
    %c0_i32_0 = arith.constant 0 : i32
    return %1, %c0_i32 : i32, i32
  }
  func.func @transform_2(%arg0: i32, %arg1: i32) -> (i32, i32, i32, i32) {
    %c0_i32 = arith.constant 0 : i32
    %c0_i32_0 = arith.constant 0 : i32
    %c0_i32_1 = arith.constant 0 : i32
    %c0_i32_2 = arith.constant 0 : i32
    return %arg0, %c0_i32, %c0_i32_0, %c0_i32_1 : i32, i32, i32, i32
  }
}

</mosaic_0001>

<llo_original>
// kernel: tpu_custom_call.1
$region0: #{tpu_custom_call.1}
  #allocation0 [shape = 'u32[]', space=smem, size = 0x4, offset = 0x4, fixed_abs, tag = 'smem constant byte address 0x4 - core index']
  #allocation1 [shape = 'u32[72,128]{1,0:T(1,128)}', space=vmem, size = 0x9000, scoped, tag = 'internal scratch']
  %s0 = inlined_call_operand.hbm [shape: f32[16,128], index: 0, kind: input, shape index: {}]
  %s1 = inlined_call_operand.hbm [shape: f32[16,128], index: 1, kind: input, shape index: {}]
  %s2 = inlined_call_operand.hbm [shape: f32[1,3,8,128], index: 2, kind: output, shape index: {}]
  %s3 = sld [smem:[#allocation0]]
  $region30: #{tpu_custom_call.1} parent=0
    _
  %s5 = ssub.s32 1, %s3
  %s6 = scalar_select 0, %s5, %s3
  $region1: #{tpu_custom_call.1} parent=0
    #allocation2 [shape = 'u8[8192]{0}', space=vmem, size = 0x2000, scoped, tag = 'input window, operand 0, single buffered']
    #allocation3 [shape = 's32[1]{0}', space=sflag, size = 0x4, scoped, tag = 'scoped memory for tpu_custom_call.1']
    #allocation4 [shape = 's32[1]{0}', space=sflag, size = 0x4, scoped, tag = 'scoped memory for tpu_custom_call.1']
    #allocation5 [shape = 'u8[8192]{0}', space=vmem, size = 0x2000, scoped, tag = 'input window, operand 1, single buffered']
    #allocation6 [shape = 's32[1]{0}', space=sflag, size = 0x4, scoped, tag = 'scoped memory for tpu_custom_call.1']
    #allocation7 [shape = 'u8[12288]{0}', space=vmem, size = 0x3000, scoped, tag = 'output window, operand 0, single buffered']
    %7 = vsyncpa [#allocation3], 0
    %8 = vsyncpa [#allocation6], 0
    %9 = vsyncpa [#allocation4], 0
    // Predicated region
    $region2: #{tpu_custom_call.1} parent=1 // pred_check
      _
    $region3: #{tpu_custom_call.1} parent=1 // pred_check_branch
      %11 = sbr.rel (0) target = $region5
    $region4: #{tpu_custom_call.1} parent=1 // pred_region
      %s12 = sadd.s32 0, 0
      %s13 = smul.u32 2, %s12
      %15 = vsyncadd [#allocation3], 0
      %s16 = smul.addr %s13, 8
      %s17 = scalar_lea.hbm %s0, %s16
      %s18 = sshll.u32 %s17, 4
      %s19 = int_to_ptr.hbm [resolvable:$true] %s18
      %s20 = sshll.u32 [#allocation2], 4
      %s21 = int_to_ptr.vmem [resolvable:$true] %s20
      %26 = dma.hbm_to_vmem [thread:$0]  %s19, 256, %s21, [#allocation3], 128, 128, 8
    $region5: #{tpu_custom_call.1} parent=1 // pred_fallthru
      _
    // Predicated region
    $region6: #{tpu_custom_call.1} parent=1 // pred_check
      _
    $region7: #{tpu_custom_call.1} parent=1 // pred_check_branch
      %28 = sbr.rel (0) target = $region9
    $region8: #{tpu_custom_call.1} parent=1 // pred_region
      %s29 = sadd.s32 0, 0
      %s30 = smul.u32 2, %s29
      %32 = vsyncadd [#allocation6], 0
      %s33 = smul.addr %s30, 8
      %s34 = scalar_lea.hbm %s1, %s33
      %s35 = sshll.u32 %s34, 4
      %s36 = int_to_ptr.hbm [resolvable:$true] %s35
      %s37 = sshll.u32 [#allocation5], 4
      %s38 = int_to_ptr.vmem [resolvable:$true] %s37
      %43 = dma.hbm_to_vmem [thread:$0]  %s36, 256, %s38, [#allocation6], 128, 128, 8
    $region9: #{tpu_custom_call.1} parent=1 // pred_fallthru
      _
    // Predicated region
    $region10: #{tpu_custom_call.1} parent=1 // pred_check
      _
    $region11: #{tpu_custom_call.1} parent=1 // pred_check_branch
      %45 = sbr.rel (0) target = $region13
    $region12: #{tpu_custom_call.1} parent=1 // pred_region
      %47 = dma.done [#allocation3], 256
    $region13: #{tpu_custom_call.1} parent=1 // pred_fallthru
      _
    // Predicated region
    $region14: #{tpu_custom_call.1} parent=1 // pred_check
      _
    $region15: #{tpu_custom_call.1} parent=1 // pred_check_branch
      %49 = sbr.rel (0) target = $region17
    $region16: #{tpu_custom_call.1} parent=1 // pred_region
      %51 = dma.done [#allocation6], 256
    $region17: #{tpu_custom_call.1} parent=1 // pred_fallthru
      _
    %s52 = sadd.s32 0, 0
    %s53 = smul.u32 2, %s52
    %s54 = sadd.s32 0, 0
    %s55 = smul.u32 2, %s54
    %p56 = scmp.eq.s32.totalorder 0, 0
    // Predicated region
    $region18: #{tpu_custom_call.1} parent=1 // pred_check
      %p57 = pneg %p56
    $region19: #{tpu_custom_call.1} parent=1 // pred_check_branch
      %59 = sbr.rel (%p57) target = $region21
    $region20: #{tpu_custom_call.1} parent=1 // pred_region
      %60 = vst [vmem:[#allocation7] sm:$0xff] 0.0
      %61 = vst [vmem:[#allocation7 + $0x8] sm:$0xff] 0.0
      %62 = vst [vmem:[#allocation7 + $0x10] sm:$0xff] 0.0
    $region21: #{tpu_custom_call.1} parent=1 // pred_fallthru
      _
    %v63 = vld [vmem:[#allocation2] sm:$0xff]
    %v64 = vld [vmem:[#allocation2 + $0x8] sm:$0xff]
    %v65 = vld [vmem:[#allocation5] sm:$0xff]
    %v66 = vld [vmem:[#allocation5 + $0x8] sm:$0xff]
    %v67 = vmul.f32 %v63, %v65
    %v68 = vmul.f32 %v64, %v66
    %v69 = vadd.f32 %v67, %v68
    %v70 = vadd.f32 %v69, 0.0
    %v71 = vadd.f32 %v63, %v64
    %v72 = vadd.f32 %v71, 0.0
    %v73 = vadd.f32 %v65, %v66
    %v74 = vadd.f32 %v73, 0.0
    %v75 = vld [vmem:[#allocation7] sm:$0xff]
    %v76 = vadd.f32 %v75, %v70
    %77 = vst [vmem:[#allocation7] sm:$0xff] %v76
    %s78 = scalar_lea.vmem [#allocation7], 8
    %v79 = vld [vmem:[%s78] sm:$0xff]
    %v80 = vadd.f32 %v79, %v72
    %81 = vst [vmem:[%s78] sm:$0xff] %v80
    %s82 = scalar_lea.vmem [#allocation7], 16
    %v83 = vld [vmem:[%s82] sm:$0xff]
    %v84 = vadd.f32 %v83, %v74
    %85 = vst [vmem:[%s82] sm:$0xff] %v84
    // Predicated region
    $region22: #{tpu_custom_call.1} parent=1 // pred_check
      _
    $region23: #{tpu_custom_call.1} parent=1 // pred_check_branch
      %87 = sbr.rel (0) target = $region25
    $region24: #{tpu_custom_call.1} parent=1 // pred_region
      %89 = vsyncadd [#allocation4], 0
      %s90 = sshll.u32 [#allocation7], 4
      %s91 = int_to_ptr.vmem [resolvable:$true] %s90
      %s92 = sshll.u32 %s2, 4
      %s93 = int_to_ptr.hbm [resolvable:$true] %s92
      %98 = dma.vmem_to_hbm [thread:$0]  %s91, 384, %s93, [#allocation4], 128, 128, 8
    $region25: #{tpu_custom_call.1} parent=1 // pred_fallthru
      _
    // Predicated region
    $region26: #{tpu_custom_call.1} parent=1 // pred_check
      _
    $region27: #{tpu_custom_call.1} parent=1 // pred_check_branch
      %100 = sbr.rel (0) target = $region29
    $region28: #{tpu_custom_call.1} parent=1 // pred_region
      %102 = dma.done [#allocation4], 384
    $region29: #{tpu_custom_call.1} parent=1 // pred_fallthru
      _
    %103 = vsyncpa [#allocation3], 1
    %104 = vsyncpa [#allocation6], 1
    %105 = vsyncpa [#allocation4], 1

</llo_original>
